<compile_context>
chip_gen: v5e
topology: v5e:2x2
jax: 0.10.0
libtpu: 0.0.40
codegen_flags: <defaults>
</compile_context>

<pallas_src>
import functools

import jax
import jax.numpy as jnp
from jax import lax
from jax.experimental import pallas as pl
from jax.experimental.pallas import tpu as pltpu


def _drl_kernel(x_ref, hl_ref, hr_ref, mask_ref,
                w1p_ref, w1c_ref, w1n_ref, b1_ref, w2_ref, b2_ref,
                o_ref, *, dilation):
    """One (batch, time-tile): dilated conv3 -> relu -> conv1x1 -> residual -> mask."""
    d = dilation
    Tt = x_ref.shape[-1]

    xt = x_ref[...]                                 # (C, Tt) streamed once (bf16/f32)
    hl = hl_ref[...]                                # (C, d) left halo
    hr = hr_ref[...]                                # (C, d) right halo

    # Shifted taps from the resident tile + tiny halos (no (3C, Tt) stack).
    tap_prev = jnp.concatenate([hl, xt[:, :Tt - d]], axis=1)   # x[t - d]
    tap_next = jnp.concatenate([xt[:, d:], hr], axis=1)        # x[t + d]

    # Dilated 3-tap conv as three accumulating MXU dots, f32 accumulation.
    acc = jnp.dot(w1c_ref[...], xt, preferred_element_type=jnp.float32)
    acc = acc + jnp.dot(w1p_ref[...], tap_prev, preferred_element_type=jnp.float32)
    acc = acc + jnp.dot(w1n_ref[...], tap_next, preferred_element_type=jnp.float32)
    out1 = jnp.maximum(acc + b1_ref[...], 0.0)                 # bias + ReLU (f32)

    # 1x1 conv == channel-mixing matmul (f32).
    out2 = jnp.dot(w2_ref[...], out1,
                   preferred_element_type=jnp.float32) + b2_ref[...]

    # Dropout is identity in eval mode; residual add + mask in f32, cast at store.
    res = (xt.astype(jnp.float32) + out2) * mask_ref[...].astype(jnp.float32)
    o_ref[...] = res.astype(o_ref.dtype)


def _round_up(x, m):
    return ((x + m - 1) // m) * m


def _choose_t_tile(T, dilation, max_t_tile, want_tiles=1):
    """Pick a multiple-of-128 time tile.

    Prefers lane-dense tiles >= 512 (HBM-roofline sweet spot), pads T in the
    wrapper instead of shrinking the tile, caps the tile so the grid exposes at
    least `want_tiles` time tiles (keeps both v7x TensorCores busy when B == 1),
    and always keeps t_tile > dilation so one halo per side suffices.
    """
    T128 = _round_up(T, 128)
    floor = 128 if T128 < 512 else 512
    floor = max(floor, _round_up(dilation + 1, 128))
    max_t_tile = max(floor, (max_t_tile // 128) * 128)

    if want_tiles > 1 and T128 >= want_tiles * floor:
        max_t_tile = min(max_t_tile,
                         max(floor, _round_up(T128 // want_tiles, 128)))

    if T128 <= max_t_tile:
        return T128                                   # single tile covers T

    # Candidate minimizing total padded length (ties -> larger tile).
    best, best_pad = floor, _round_up(T128, floor)
    for cand in range(floor, max_t_tile + 1, 128):
        padded = _round_up(T128, cand)
        if padded < best_pad or (padded == best_pad and cand > best):
            best, best_pad = cand, padded
    return best


def dilated_residual_layer(x, mask, w1_oiw, b1, w2_oiw, b2, *, dilation,
                           compute_dtype=None, max_t_tile=2048):
    """Forward of MSTCN DilatedResidualLayer (eval mode).

    x: (B, C, T); mask: (B, M, T) (only row 0 is used);
    w1_oiw: (C, C, 3) torch Conv1d weight, b1: (C,);
    w2_oiw: (C, C, 1) torch Conv1d weight, b2: (C,).
    Returns (B, C, T) in `compute_dtype` (defaults to x.dtype).
    """
    B, C, T = x.shape
    assert w1_oiw.shape == (C, C, 3) and w2_oiw.shape == (C, C, 1)
    d = int(dilation)
    assert 0 < d < T, "dilation must be positive and smaller than the sequence"

    cdt = jnp.dtype(x.dtype if compute_dtype is None else compute_dtype)

    want_tiles = 2 if B == 1 else 1                  # feed both v7x TensorCores
    t_tile = _choose_t_tile(T, d, max_t_tile, want_tiles=want_tiles)
    nt = pl.cdiv(T, t_tile)
    T_pad = nt * t_tile
    assert d < t_tile

    # Stream activations in the (typically bf16) compute dtype; accumulate f32.
    xs = x.astype(cdt)
    mask_row = mask[:, 0:1, :].astype(cdt)
    if T_pad != T:
        # Zero pad == Conv1d zero padding at the true right edge; padded tail
        # is sliced off below.  TODO(synk): masked ragged-tail path to avoid
        # this one-off pad copy for non-128-multiple T.
        pad = ((0, 0), (0, 0), (0, T_pad - T))
        xs = jnp.pad(xs, pad)
        mask_row = jnp.pad(mask_row, pad)

    # Per-tap weights (tiny, VMEM-resident via constant index maps).
    w1p = w1_oiw[:, :, 0].astype(cdt)                # tap x[t - d]
    w1c = w1_oiw[:, :, 1].astype(cdt)                # tap x[t]
    w1n = w1_oiw[:, :, 2].astype(cdt)                # tap x[t + d]
    b1c = b1.astype(jnp.float32).reshape(C, 1)
    w2m = w2_oiw[:, :, 0].astype(jnp.float32)
    b2c = b2.astype(jnp.float32).reshape(C, 1)

    # Cross-tile halos, split left/right: (B, NT, C, d) each, zero at sequence
    # edges (== Conv1d zero padding).  Tiny side inputs (2*d / t_tile of x).
    if nt == 1:
        halo_l = jnp.zeros((B, 1, C, d), cdt)
        halo_r = jnp.zeros((B, 1, C, d), cdt)
    else:
        xr = xs.reshape(B, C, nt, t_tile)
        halo_l = jnp.transpose(
            jnp.pad(xr[:, :, :-1, t_tile - d:], ((0, 0), (0, 0), (1, 0), (0, 0))),
            (0, 2, 1, 3))                            # (B, NT, C, d)
        halo_r = jnp.transpose(
            jnp.pad(xr[:, :, 1:, :d], ((0, 0), (0, 0), (0, 1), (0, 0))),
            (0, 2, 1, 3))                            # (B, NT, C, d)

    kernel = functools.partial(_drl_kernel, dilation=d)

    out = pl.pallas_call(
        kernel,
        out_shape=jax.ShapeDtypeStruct((B, C, T_pad), cdt),
        grid=(B, nt),
        in_specs=[
            pl.BlockSpec((None, C, t_tile), lambda b, j: (b, 0, j)),       # x tile
            pl.BlockSpec((None, None, C, d), lambda b, j: (b, j, 0, 0)),   # halo L
            pl.BlockSpec((None, None, C, d), lambda b, j: (b, j, 0, 0)),   # halo R
            pl.BlockSpec((None, 1, t_tile), lambda b, j: (b, 0, j)),       # mask row
            pl.BlockSpec((C, C), lambda b, j: (0, 0)),                     # w1 tap -d
            pl.BlockSpec((C, C), lambda b, j: (0, 0)),                     # w1 tap  0
            pl.BlockSpec((C, C), lambda b, j: (0, 0)),                     # w1 tap +d
            pl.BlockSpec((C, 1), lambda b, j: (0, 0)),                     # b1
            pl.BlockSpec((C, C), lambda b, j: (0, 0)),                     # w2 (1x1)
            pl.BlockSpec((C, 1), lambda b, j: (0, 0)),                     # b2
        ],
        out_specs=pl.BlockSpec((None, C, t_tile), lambda b, j: (b, 0, j)),
        compiler_params=pltpu.CompilerParams(
            dimension_semantics=("parallel", "parallel"),
            vmem_limit_bytes=48 * 1024 * 1024),      # headroom under v7x's 64 MiB
    )(xs, halo_l, halo_r, mask_row, w1p, w1c, w1n, b1c, w2m, b2c)

    return out[:, :, :T] if T_pad != T else out


def _reference(x, mask, w1_oiw, b1, w2_oiw, b2, *, dilation):
    """Pure-JAX reference matching the PyTorch forward (eval mode), f32."""
    dn = ("NCH", "OIH", "NCH")   # 1-D conv treated as N,C,W
    out = lax.conv_general_dilated(
        x, w1_oiw, window_strides=(1,), padding=[(dilation, dilation)],
        rhs_dilation=(dilation,), dimension_numbers=dn)
    out = jnp.maximum(out + b1[None, :, None], 0.0)
    out = lax.conv_general_dilated(
        out, w2_oiw, window_strides=(1,), padding=[(0, 0)], dimension_numbers=dn)
    out = out + b2[None, :, None]
    return (x + out) * mask[:, 0:1, :]


if __name__ == "__main__":
    key = jax.random.PRNGKey(0)

    def run_case(case_key, *, B, C, T, M, dilation, compute_dtype,
                 max_t_tile, atol, rtol):
        kx, kw1, kb1, kw2, kb2 = jax.random.split(case_key, 5)
        x = jax.random.normal(kx, (B, C, T), dtype=jnp.float32)
        mask = jnp.ones((B, M, T), dtype=jnp.float32)
        mask = mask.at[-1, :, (3 * T) // 4:].set(0.0)   # variable-length mask

        w1 = 0.1 * jax.random.normal(kw1, (C, C, 3), dtype=jnp.float32)
        b1 = 0.1 * jax.random.normal(kb1, (C,), dtype=jnp.float32)
        w2 = 0.1 * jax.random.normal(kw2, (C, C, 1), dtype=jnp.float32)
        b2 = 0.1 * jax.random.normal(kb2, (C,), dtype=jnp.float32)

        cdt = jnp.dtype(compute_dtype)
        x_in = x.astype(cdt)

        out = dilated_residual_layer(x_in, mask, w1, b1, w2, b2,
                                     dilation=dilation, compute_dtype=cdt,
                                     max_t_tile=max_t_tile)
        out = jax.block_until_ready(out)
        assert out.shape == (B, C, T) and out.dtype == cdt

        # Reference uses the same rounded activations / tap weights the kernel
        # streams (accumulation differences only), computed in f32.
        x_ref = x_in.astype(jnp.float32)
        w1_ref = w1.astype(cdt).astype(jnp.float32)
        ref = _reference(x_ref, mask, w1_ref, b1, w2, b2, dilation=dilation)
        ok = jnp.allclose(out.astype(jnp.float32), ref, atol=atol, rtol=rtol)
        assert ok, "mismatch vs reference (max abs err {})".format(
            jnp.max(jnp.abs(out.astype(jnp.float32) - ref)))

    k1, k2, k3 = jax.random.split(key, 3)
    # 1) f32, single time tile (tight tolerance validation).
    run_case(k1, B=2, C=16, T=128, M=4, dilation=2,
             compute_dtype=jnp.float32, max_t_tile=2048, atol=1e-4, rtol=1e-4)
    # 2) f32, B=1 -> time split into 2 tiles of 512 (halo path + v7x 2-TC split).
    run_case(k2, B=1, C=16, T=1024, M=4, dilation=4,
             compute_dtype=jnp.float32, max_t_tile=2048, atol=1e-4, rtol=1e-4)
    # 3) bf16 streaming, ragged T (pad path) + halos, looser tolerance.
    run_case(k3, B=1, C=16, T=1000, M=4, dilation=8,
             compute_dtype=jnp.bfloat16, max_t_tile=2048, atol=2e-2, rtol=2e-2)

    print("KERNEL_OK")
</pallas_src>

<mosaic_0001>
module attributes {stable_mosaic.version = 11 : i64} {
  func.func @_drl_kernel(%arg0: i32, %arg1: i32, %arg2: memref<1x16x128xf32, #tpu.memory_space<vmem>>, %arg3: memref<1x1x16x2xf32, #tpu.memory_space<vmem>>, %arg4: memref<1x1x16x2xf32, #tpu.memory_space<vmem>>, %arg5: memref<1x1x128xf32, #tpu.memory_space<vmem>>, %arg6: memref<16x16xf32, #tpu.memory_space<vmem>>, %arg7: memref<16x16xf32, #tpu.memory_space<vmem>>, %arg8: memref<16x16xf32, #tpu.memory_space<vmem>>, %arg9: memref<16x1xf32, #tpu.memory_space<vmem>>, %arg10: memref<16x16xf32, #tpu.memory_space<vmem>>, %arg11: memref<16x1xf32, #tpu.memory_space<vmem>>, %arg12: memref<1x16x128xf32, #tpu.memory_space<vmem>>) attributes {dimension_semantics = [#tpu.dimension_semantics<parallel>, #tpu.dimension_semantics<parallel>], iteration_bounds = array<i64: 2, 1>, scalar_prefetch = 0 : i64, scratch_operands = 0 : i64, tpu.core_type = #tpu.core_type<tc>, window_params = [{transform_indices = @transform_0, window_bounds = array<i64: 1, 16, 128>}, {transform_indices = @transform_1, window_bounds = array<i64: 1, 1, 16, 2>}, {transform_indices = @transform_2, window_bounds = array<i64: 1, 1, 16, 2>}, {transform_indices = @transform_3, window_bounds = array<i64: 1, 1, 128>}, {pipeline_mode = #tpu.pipeline_mode<synchronous>, transform_indices = @transform_4, window_bounds = array<i64: 16, 16>}, {pipeline_mode = #tpu.pipeline_mode<synchronous>, transform_indices = @transform_5, window_bounds = array<i64: 16, 16>}, {pipeline_mode = #tpu.pipeline_mode<synchronous>, transform_indices = @transform_6, window_bounds = array<i64: 16, 16>}, {pipeline_mode = #tpu.pipeline_mode<synchronous>, transform_indices = @transform_7, window_bounds = array<i64: 16, 1>}, {pipeline_mode = #tpu.pipeline_mode<synchronous>, transform_indices = @transform_8, window_bounds = array<i64: 16, 16>}, {pipeline_mode = #tpu.pipeline_mode<synchronous>, transform_indices = @transform_9, window_bounds = array<i64: 16, 1>}, {transform_indices = @transform_10, window_bounds = array<i64: 1, 16, 128>}]} {
    %c0 = arith.constant 0 : index
    %c0_0 = arith.constant 0 : index
    %c0_1 = arith.constant 0 : index
    %0 = vector.load %arg2[%c0, %c0_0, %c0_1] : memref<1x16x128xf32, #tpu.memory_space<vmem>>, vector<1x16x128xf32>
    %1 = vector.shape_cast %0 : vector<1x16x128xf32> to vector<16x128xf32>
    %c0_2 = arith.constant 0 : index
    %c0_3 = arith.constant 0 : index
    %c0_4 = arith.constant 0 : index
    %c0_5 = arith.constant 0 : index
    %2 = vector.load %arg3[%c0_2, %c0_3, %c0_4, %c0_5] : memref<1x1x16x2xf32, #tpu.memory_space<vmem>>, vector<1x1x16x2xf32>
    %3 = vector.shape_cast %2 : vector<1x1x16x2xf32> to vector<16x2xf32>
    %c0_6 = arith.constant 0 : index
    %c0_7 = arith.constant 0 : index
    %c0_8 = arith.constant 0 : index
    %c0_9 = arith.constant 0 : index
    %4 = vector.load %arg4[%c0_6, %c0_7, %c0_8, %c0_9] : memref<1x1x16x2xf32, #tpu.memory_space<vmem>>, vector<1x1x16x2xf32>
    %5 = vector.shape_cast %4 : vector<1x1x16x2xf32> to vector<16x2xf32>
    %6 = vector.extract_strided_slice %1 {offsets = [0, 0], sizes = [16, 126], strides = [1, 1]} : vector<16x128xf32> to vector<16x126xf32>
    %7 = tpu.concatenate %3, %6 in 1 : vector<16x2xf32>, vector<16x126xf32> -> vector<16x128xf32>
    %8 = vector.extract_strided_slice %1 {offsets = [0, 2], sizes = [16, 126], strides = [1, 1]} : vector<16x128xf32> to vector<16x126xf32>
    %9 = tpu.concatenate %8, %5 in 1 : vector<16x126xf32>, vector<16x2xf32> -> vector<16x128xf32>
    %c0_10 = arith.constant 0 : index
    %c0_11 = arith.constant 0 : index
    %10 = vector.load %arg7[%c0_10, %c0_11] : memref<16x16xf32, #tpu.memory_space<vmem>>, vector<16x16xf32>
    %cst = arith.constant dense<0.000000e+00> : vector<16x128xf32>
    %11 = tpu.matmul %10, %1, %cst {dimension_numbers = #tpu.dot_dimension_numbers<[1], [0], [0], [1], [0, 0, 1, 1], [], []>} : vector<16x16xf32>, vector<16x128xf32>, vector<16x128xf32> -> vector<16x128xf32>
    %c0_12 = arith.constant 0 : index
    %c0_13 = arith.constant 0 : index
    %12 = vector.load %arg6[%c0_12, %c0_13] : memref<16x16xf32, #tpu.memory_space<vmem>>, vector<16x16xf32>
    %cst_14 = arith.constant dense<0.000000e+00> : vector<16x128xf32>
    %13 = tpu.matmul %12, %7, %cst_14 {dimension_numbers = #tpu.dot_dimension_numbers<[1], [0], [0], [1], [0, 0, 1, 1], [], []>} : vector<16x16xf32>, vector<16x128xf32>, vector<16x128xf32> -> vector<16x128xf32>
    %14 = arith.addf %11, %13 : vector<16x128xf32>
    %c0_15 = arith.constant 0 : index
    %c0_16 = arith.constant 0 : index
    %15 = vector.load %arg8[%c0_15, %c0_16] : memref<16x16xf32, #tpu.memory_space<vmem>>, vector<16x16xf32>
    %cst_17 = arith.constant dense<0.000000e+00> : vector<16x128xf32>
    %16 = tpu.matmul %15, %9, %cst_17 {dimension_numbers = #tpu.dot_dimension_numbers<[1], [0], [0], [1], [0, 0, 1, 1], [], []>} : vector<16x16xf32>, vector<16x128xf32>, vector<16x128xf32> -> vector<16x128xf32>
    %17 = arith.addf %14, %16 : vector<16x128xf32>
    %c0_18 = arith.constant 0 : index
    %c0_19 = arith.constant 0 : index
    %18 = vector.load %arg9[%c0_18, %c0_19] : memref<16x1xf32, #tpu.memory_space<vmem>>, vector<16x1xf32>
    %19 = vector.broadcast %18 : vector<16x1xf32> to vector<16x128xf32>
    %20 = arith.addf %17, %19 : vector<16x128xf32>
    %cst_20 = arith.constant 0.000000e+00 : f32
    %21 = vector.broadcast %cst_20 : f32 to vector<16x128xf32>
    %22 = arith.maximumf %20, %21 : vector<16x128xf32>
    %c0_21 = arith.constant 0 : index
    %c0_22 = arith.constant 0 : index
    %23 = vector.load %arg10[%c0_21, %c0_22] : memref<16x16xf32, #tpu.memory_space<vmem>>, vector<16x16xf32>
    %cst_23 = arith.constant dense<0.000000e+00> : vector<16x128xf32>
    %24 = tpu.matmul %23, %22, %cst_23 {dimension_numbers = #tpu.dot_dimension_numbers<[1], [0], [0], [1], [0, 0, 1, 1], [], []>} : vector<16x16xf32>, vector<16x128xf32>, vector<16x128xf32> -> vector<16x128xf32>
    %c0_24 = arith.constant 0 : index
    %c0_25 = arith.constant 0 : index
    %25 = vector.load %arg11[%c0_24, %c0_25] : memref<16x1xf32, #tpu.memory_space<vmem>>, vector<16x1xf32>
    %26 = vector.broadcast %25 : vector<16x1xf32> to vector<16x128xf32>
    %27 = arith.addf %24, %26 : vector<16x128xf32>
    %28 = arith.addf %1, %27 : vector<16x128xf32>
    %c0_26 = arith.constant 0 : index
    %c0_27 = arith.constant 0 : index
    %c0_28 = arith.constant 0 : index
    %29 = vector.load %arg5[%c0_26, %c0_27, %c0_28] : memref<1x1x128xf32, #tpu.memory_space<vmem>>, vector<1x1x128xf32>
    %30 = vector.shape_cast %29 : vector<1x1x128xf32> to vector<1x128xf32>
    %31 = vector.broadcast %30 : vector<1x128xf32> to vector<16x128xf32>
    %32 = arith.mulf %28, %31 : vector<16x128xf32>
    %c0_29 = arith.constant 0 : index
    %c0_30 = arith.constant 0 : index
    %c0_31 = arith.constant 0 : index
    %33 = vector.load %arg12[%c0_29, %c0_30, %c0_31] : memref<1x16x128xf32, #tpu.memory_space<vmem>>, vector<1x16x128xf32>
    %34 = vector.shape_cast %33 : vector<1x16x128xf32> to vector<16x128xf32>
    %35 = vector.shape_cast %32 : vector<16x128xf32> to vector<1x16x128xf32>
    tpu.vector_store %arg12[%c0_29, %c0_30, %c0_31], %35 {strides = array<i32>} : memref<1x16x128xf32, #tpu.memory_space<vmem>>, vector<1x16x128xf32>,
    return
  }
  func.func @transform_0(%arg0: i32, %arg1: i32) -> (i32, i32, i32) {
    %c0_i32 = arith.constant 0 : i32
    %c0_i32_0 = arith.constant 0 : i32
    return %arg0, %c0_i32, %arg1 : i32, i32, i32
  }
  func.func @transform_1(%arg0: i32, %arg1: i32) -> (i32, i32, i32, i32) {
    %c0_i32 = arith.constant 0 : i32
    %c0_i32_0 = arith.constant 0 : i32
    %c0_i32_1 = arith.constant 0 : i32
    return %arg0, %arg1, %c0_i32, %c0_i32_0 : i32, i32, i32, i32
  }
  func.func @transform_2(%arg0: i32, %arg1: i32) -> (i32, i32, i32, i32) {
    %c0_i32 = arith.constant 0 : i32
    %c0_i32_0 = arith.constant 0 : i32
    %c0_i32_1 = arith.constant 0 : i32
    return %arg0, %arg1, %c0_i32, %c0_i32_0 : i32, i32, i32, i32
  }
  func.func @transform_3(%arg0: i32, %arg1: i32) -> (i32, i32, i32) {
    %c0_i32 = arith.constant 0 : i32
    %c0_i32_0 = arith.constant 0 : i32
    return %arg0, %c0_i32, %arg1 : i32, i32, i32
  }
  func.func @transform_4(%arg0: i32, %arg1: i32) -> (i32, i32) {
    %c0_i32 = arith.constant 0 : i32
    %c0_i32_0 = arith.constant 0 : i32
    %c0_i32_1 = arith.constant 0 : i32
    return %c0_i32, %c0_i32_0 : i32, i32
  }
  func.func @transform_5(%arg0: i32, %arg1: i32) -> (i32, i32) {
    %c0_i32 = arith.constant 0 : i32
    %c0_i32_0 = arith.constant 0 : i32
    %c0_i32_1 = arith.constant 0 : i32
    return %c0_i32, %c0_i32_0 : i32, i32
  }
  func.func @transform_6(%arg0: i32, %arg1: i32) -> (i32, i32) {
    %c0_i32 = arith.constant 0 : i32
    %c0_i32_0 = arith.constant 0 : i32
    %c0_i32_1 = arith.constant 0 : i32
    return %c0_i32, %c0_i32_0 : i32, i32
  }
  func.func @transform_7(%arg0: i32, %arg1: i32) -> (i32, i32) {
    %c0_i32 = arith.constant 0 : i32
    %c0_i32_0 = arith.constant 0 : i32
    %c0_i32_1 = arith.constant 0 : i32
    return %c0_i32, %c0_i32_0 : i32, i32
  }
  func.func @transform_8(%arg0: i32, %arg1: i32) -> (i32, i32) {
    %c0_i32 = arith.constant 0 : i32
    %c0_i32_0 = arith.constant 0 : i32
    %c0_i32_1 = arith.constant 0 : i32
    return %c0_i32, %c0_i32_0 : i32, i32
  }
  func.func @transform_9(%arg0: i32, %arg1: i32) -> (i32, i32) {
    %c0_i32 = arith.constant 0 : i32
    %c0_i32_0 = arith.constant 0 : i32
    %c0_i32_1 = arith.constant 0 : i32
    return %c0_i32, %c0_i32_0 : i32, i32
  }
  func.func @transform_10(%arg0: i32, %arg1: i32) -> (i32, i32, i32) {
    %c0_i32 = arith.constant 0 : i32
    %c0_i32_0 = arith.constant 0 : i32
    return %arg0, %c0_i32, %arg1 : i32, i32, i32
  }
}

</mosaic_0001>

<llo_original>
// kernel: tpu_custom_call.1
$region0: #{tpu_custom_call.1}
  #allocation0 [shape = 'u32[]', space=smem, size = 0x4, offset = 0x4, fixed_abs, tag = 'smem constant byte address 0x4 - core index']
  #allocation1 [shape = 'u32[72,128]{1,0:T(1,128)}', space=vmem, size = 0x9000, scoped, tag = 'internal scratch']
  %s0 = inlined_call_operand.vmem [shape: f32[2,16,128], index: 0, kind: input, shape index: {}]
  %s1 = inlined_call_operand.vmem [shape: f32[2,1,16,2], index: 1, kind: input, shape index: {}]
  %s2 = inlined_call_operand.vmem [shape: f32[2,1,16,2], index: 2, kind: input, shape index: {}]
  %s3 = inlined_call_operand.hbm [shape: f32[2,1,128], index: 3, kind: input, shape index: {}]
  %s4 = inlined_call_operand.vmem [shape: f32[16,16], index: 4, kind: input, shape index: {}]
  %s5 = inlined_call_operand.vmem [shape: f32[16,16], index: 5, kind: input, shape index: {}]
  %s6 = inlined_call_operand.vmem [shape: f32[16,16], index: 6, kind: input, shape index: {}]
  %s7 = inlined_call_operand.vmem [shape: f32[16,1], index: 7, kind: input, shape index: {}]
  %s8 = inlined_call_operand.vmem [shape: f32[16,16], index: 8, kind: input, shape index: {}]
  %s9 = inlined_call_operand.vmem [shape: f32[16,1], index: 9, kind: input, shape index: {}]
  %s10 = inlined_call_operand.hbm [shape: f32[2,16,128], index: 10, kind: output, shape index: {}]
  %s11 = sld [smem:[#allocation0]]
  $region77: #{tpu_custom_call.1} parent=0
    _
  %s13 = ssub.s32 1, %s11
  %s14 = scalar_select 0, %s13, %s11
  $region1: #{tpu_custom_call.1} parent=0
    #allocation2 [shape = 'u8[1024]{0}', space=vmem, size = 0x400, scoped, tag = 'input window, operand 3']
    #allocation3 [shape = 's32[2]{0}', space=sflag, size = 0x8, scoped, tag = 'scoped memory for tpu_custom_call.1']
    #allocation4 [shape = 's32[2]{0}', space=sflag, size = 0x8, scoped, tag = 'scoped memory for tpu_custom_call.1']
    #allocation5 [shape = 'u8[16384]{0}', space=vmem, size = 0x4000, scoped, tag = 'output window, operand 0']
    %15 = vsyncpa [#allocation3], 0
    %s16 = scalar_lea.sflag [#allocation3], 1
    %17 = vsyncpa %s16, 0
    %18 = vsyncpa [#allocation4], 0
    %s19 = scalar_lea.sflag [#allocation4], 1
    %20 = vsyncpa %s19, 0
    loop: start=0, step=1, limit=4
    $region2: #{tpu_custom_call.1} parent=1 // loop_pre_header
      _
    $region3: #{tpu_custom_call.1} parent=1 // loop_header
      %s22 = sphi 0, %s26
      %p23 = scmp.ge.s32.totalorder %s22, 4
      %s29 = sphi 0, %s41
      %s30 = sphi 0, %s37
      %s31 = sphi 0, %s29
      %s32 = sphi 0, %s30
      %s33 = sphi 0, %s31
      %s34 = sphi 0, %s32
      %s46 = sphi 0, %s48
      %s49 = sphi 0, %s46
      %s50 = sphi 0, %s49
      %s66 = sphi 0, %s50
      %s74 = sphi 0, %s76
      %s77 = sphi 0, %s74
      %s78 = sphi 0, %s77
      %s94 = sphi 0, %s78
      %s102 = sphi 0, %s104
      %s105 = sphi 0, %s102
      %s106 = sphi 0, %s105
      %s122 = sphi 0, %s106
      %s130 = sphi 0, %s132
      %s133 = sphi 0, %s130
      %s134 = sphi 0, %s133
      %s150 = sphi 0, %s134
      %s154 = sphi 0, %s154
      %s156 = sphi 0, %s154
      %s157 = sphi 0, %s156
      %s171 = sphi 0, %s157
      %s175 = sphi 0, %s175
      %s177 = sphi 0, %s175
      %s178 = sphi 0, %s177
      %s192 = sphi 0, %s178
      %s196 = sphi 0, %s196
      %s198 = sphi 0, %s196
      %s199 = sphi 0, %s198
      %s213 = sphi 0, %s199
      %s217 = sphi 0, %s217
      %s219 = sphi 0, %s217
      %s220 = sphi 0, %s219
      %s234 = sphi 0, %s220
      %s238 = sphi 0, %s238
      %s240 = sphi 0, %s238
      %s241 = sphi 0, %s240
      %s255 = sphi 0, %s241
      %s259 = sphi 0, %s259
      %s261 = sphi 0, %s259
      %s262 = sphi 0, %s261
      %s276 = sphi 0, %s262
      %s284 = sphi 0, %s286
      %s287 = sphi 0, %s284
      %s288 = sphi 0, %s287
      %s304 = sphi 0, %s288
    $region4: #{tpu_custom_call.1} parent=1 // loop_header_branch
      %25 = sbr.rel (%p23) target = $region8
    $region5: #{tpu_custom_call.1} parent=1 // loop_body
      %s27 = ssub.s32 %s22, 1
      %s28 = ssub.s32 %s22, 2
      %s35 = sadd.s32 1, %s30
      %p36 = scmp.ge.s32.totalorder %s35, 1
      %s37 = scalar_select %p36, 0, %s35
      %s38 = sadd.s32 1, %s29
      %s39 = scalar_select %p36, %s38, %s29
      %p40 = scmp.ge.s32.totalorder %s39, 2
      %s41 = scalar_select %p40, 0, %s39
      %s42 = ssub.s32 %s29, %s41
      %s43 = ssub.s32 %s30, %s37
      %s44 = sor.u32 %s42, %s43
      %p45 = scmp.eq.s32.totalorder %s44, 0
      %s47 = sadd.s32 %s46, 1
      %s48 = scalar_select %p45, %s46, %s47
      %p51 = pneg %p45
      %p52 = scmp.eq.s32.totalorder %s22, 1
      %p53 = por %p51, %p52
      %p54 = scmp.ne.s32.totalorder %s46, %s49
      %p55 = scmp.eq.s32.totalorder %s22, 0
      %p56 = por %p54, %p55
      %p57 = scmp.ne.s32.totalorder %s46, %s49
      %p58 = scmp.eq.s32.totalorder %s27, 1
      %p59 = por %p57, %p58
      %p60 = scmp.ne.s32.totalorder %s49, %s50
      %p61 = scmp.eq.s32.totalorder %s27, 0
      %p62 = por %p60, %p61
      %p63 = scmp.ne.s32.totalorder %s49, %s50
      %p64 = scmp.eq.s32.totalorder %s28, 1
      %p65 = por %p63, %p64
      %p67 = scmp.ne.s32.totalorder %s50, %s66
      %p68 = scmp.eq.s32.totalorder %s28, 0
      %p69 = por %p67, %p68
      %s70 = ssub.s32 %s29, %s41
      %s71 = ssub.s32 %s30, %s37
      %s72 = sor.u32 %s70, %s71
      %p73 = scmp.eq.s32.totalorder %s72, 0
      %s75 = sadd.s32 %s74, 1
      %s76 = scalar_select %p73, %s74, %s75
      %p79 = pneg %p73
      %p80 = scmp.eq.s32.totalorder %s22, 1
      %p81 = por %p79, %p80
      %p82 = scmp.ne.s32.totalorder %s74, %s77
      %p83 = scmp.eq.s32.totalorder %s22, 0
      %p84 = por %p82, %p83
      %p85 = scmp.ne.s32.totalorder %s74, %s77
      %p86 = scmp.eq.s32.totalorder %s27, 1
      %p87 = por %p85, %p86
      %p88 = scmp.ne.s32.totalorder %s77, %s78
      %p89 = scmp.eq.s32.totalorder %s27, 0
      %p90 = por %p88, %p89
      %p91 = scmp.ne.s32.totalorder %s77, %s78
      %p92 = scmp.eq.s32.totalorder %s28, 1
      %p93 = por %p91, %p92
      %p95 = scmp.ne.s32.totalorder %s78, %s94
      %p96 = scmp.eq.s32.totalorder %s28, 0
      %p97 = por %p95, %p96
      %s98 = ssub.s32 %s29, %s41
      %s99 = ssub.s32 %s30, %s37
      %s100 = sor.u32 %s98, %s99
      %p101 = scmp.eq.s32.totalorder %s100, 0
      %s103 = sadd.s32 %s102, 1
      %s104 = scalar_select %p101, %s102, %s103
      %p107 = pneg %p101
      %p108 = scmp.eq.s32.totalorder %s22, 1
      %p109 = por %p107, %p108
      %p110 = scmp.ne.s32.totalorder %s102, %s105
      %p111 = scmp.eq.s32.totalorder %s22, 0
      %p112 = por %p110, %p111
      %p113 = scmp.ne.s32.totalorder %s102, %s105
      %p114 = scmp.eq.s32.totalorder %s27, 1
      %p115 = por %p113, %p114
      %p116 = scmp.ne.s32.totalorder %s105, %s106
      %p117 = scmp.eq.s32.totalorder %s27, 0
      %p118 = por %p116, %p117
      %p119 = scmp.ne.s32.totalorder %s105, %s106
      %p120 = scmp.eq.s32.totalorder %s28, 1
      %p121 = por %p119, %p120
      %p123 = scmp.ne.s32.totalorder %s106, %s122
      %p124 = scmp.eq.s32.totalorder %s28, 0
      %p125 = por %p123, %p124
      %s126 = ssub.s32 %s29, %s41
      %s127 = ssub.s32 %s30, %s37
      %s128 = sor.u32 %s126, %s127
      %p129 = scmp.eq.s32.totalorder %s128, 0
      %s131 = sadd.s32 %s130, 1
      %s132 = scalar_select %p129, %s130, %s131
      %p135 = pneg %p129
      %p136 = scmp.eq.s32.totalorder %s22, 1
      %p137 = por %p135, %p136
      %p138 = scmp.ne.s32.totalorder %s130, %s133
      %p139 = scmp.eq.s32.totalorder %s22, 0
      %p140 = por %p138, %p139
      %p141 = scmp.ne.s32.totalorder %s130, %s133
      %p142 = scmp.eq.s32.totalorder %s27, 1
      %p143 = por %p141, %p142
      %p144 = scmp.ne.s32.totalorder %s133, %s134
      %p145 = scmp.eq.s32.totalorder %s27, 0
      %p146 = por %p144, %p145
      %p147 = scmp.ne.s32.totalorder %s133, %s134
      %p148 = scmp.eq.s32.totalorder %s28, 1
      %p149 = por %p147, %p148
      %p151 = scmp.ne.s32.totalorder %s134, %s150
      %p152 = scmp.eq.s32.totalorder %s28, 0
      %p153 = por %p151, %p152
      %s155 = sadd.s32 %s154, 1
      %p158 = scmp.eq.s32.totalorder %s22, 1
      %p159 = scmp.ne.s32.totalorder %s154, %s156
      %p160 = scmp.eq.s32.totalorder %s22, 0
      %p161 = por %p159, %p160
      %p162 = scmp.ne.s32.totalorder %s154, %s156
      %p163 = scmp.eq.s32.totalorder %s27, 1
      %p164 = por %p162, %p163
      %p165 = scmp.ne.s32.totalorder %s156, %s157
      %p166 = scmp.eq.s32.totalorder %s27, 0
      %p167 = por %p165, %p166
      %p168 = scmp.ne.s32.totalorder %s156, %s157
      %p169 = scmp.eq.s32.totalorder %s28, 1
      %p170 = por %p168, %p169
      %p172 = scmp.ne.s32.totalorder %s157, %s171
      %p173 = scmp.eq.s32.totalorder %s28, 0
      %p174 = por %p172, %p173
      %s176 = sadd.s32 %s175, 1
      %p179 = scmp.eq.s32.totalorder %s22, 1
      %p180 = scmp.ne.s32.totalorder %s175, %s177
      %p181 = scmp.eq.s32.totalorder %s22, 0
      %p182 = por %p180, %p181
      %p183 = scmp.ne.s32.totalorder %s175, %s177
      %p184 = scmp.eq.s32.totalorder %s27, 1
      %p185 = por %p183, %p184
      %p186 = scmp.ne.s32.totalorder %s177, %s178
      %p187 = scmp.eq.s32.totalorder %s27, 0
      %p188 = por %p186, %p187
      %p189 = scmp.ne.s32.totalorder %s177, %s178
      %p190 = scmp.eq.s32.totalorder %s28, 1
      %p191 = por %p189, %p190
      %p193 = scmp.ne.s32.totalorder %s178, %s192
      %p194 = scmp.eq.s32.totalorder %s28, 0
      %p195 = por %p193, %p194
      %s197 = sadd.s32 %s196, 1
      %p200 = scmp.eq.s32.totalorder %s22, 1
      %p201 = scmp.ne.s32.totalorder %s196, %s198
      %p202 = scmp.eq.s32.totalorder %s22, 0
      %p203 = por %p201, %p202
      %p204 = scmp.ne.s32.totalorder %s196, %s198
      %p205 = scmp.eq.s32.totalorder %s27, 1
      %p206 = por %p204, %p205
      %p207 = scmp.ne.s32.totalorder %s198, %s199
      %p208 = scmp.eq.s32.totalorder %s27, 0
      %p209 = por %p207, %p208
      %p210 = scmp.ne.s32.totalorder %s198, %s199
      %p211 = scmp.eq.s32.totalorder %s28, 1
      %p212 = por %p210, %p211
      %p214 = scmp.ne.s32.totalorder %s199, %s213
      %p215 = scmp.eq.s32.totalorder %s28, 0
      %p216 = por %p214, %p215
      %s218 = sadd.s32 %s217, 1
      %p221 = scmp.eq.s32.totalorder %s22, 1
      %p222 = scmp.ne.s32.totalorder %s217, %s219
      %p223 = scmp.eq.s32.totalorder %s22, 0
      %p224 = por %p222, %p223
      %p225 = scmp.ne.s32.totalorder %s217, %s219
      %p226 = scmp.eq.s32.totalorder %s27, 1
      %p227 = por %p225, %p226
      %p228 = scmp.ne.s32.totalorder %s219, %s220
      %p229 = scmp.eq.s32.totalorder %s27, 0
      %p230 = por %p228, %p229
      %p231 = scmp.ne.s32.totalorder %s219, %s220
      %p232 = scmp.eq.s32.totalorder %s28, 1
      %p233 = por %p231, %p232
      %p235 = scmp.ne.s32.totalorder %s220, %s234
      %p236 = scmp.eq.s32.totalorder %s28, 0
      %p237 = por %p235, %p236
      %s239 = sadd.s32 %s238, 1
      %p242 = scmp.eq.s32.totalorder %s22, 1
      %p243 = scmp.ne.s32.totalorder %s238, %s240
      %p244 = scmp.eq.s32.totalorder %s22, 0
      %p245 = por %p243, %p244
      %p246 = scmp.ne.s32.totalorder %s238, %s240
      %p247 = scmp.eq.s32.totalorder %s27, 1
      %p248 = por %p246, %p247
      %p249 = scmp.ne.s32.totalorder %s240, %s241
      %p250 = scmp.eq.s32.totalorder %s27, 0
      %p251 = por %p249, %p250
      %p252 = scmp.ne.s32.totalorder %s240, %s241
      %p253 = scmp.eq.s32.totalorder %s28, 1
      %p254 = por %p252, %p253
      %p256 = scmp.ne.s32.totalorder %s241, %s255
      %p257 = scmp.eq.s32.totalorder %s28, 0
      %p258 = por %p256, %p257
      %s260 = sadd.s32 %s259, 1
      %p263 = scmp.eq.s32.totalorder %s22, 1
      %p264 = scmp.ne.s32.totalorder %s259, %s261
      %p265 = scmp.eq.s32.totalorder %s22, 0
      %p266 = por %p264, %p265
      %p267 = scmp.ne.s32.totalorder %s259, %s261
      %p268 = scmp.eq.s32.totalorder %s27, 1
      %p269 = por %p267, %p268
      %p270 = scmp.ne.s32.totalorder %s261, %s262
      %p271 = scmp.eq.s32.totalorder %s27, 0
      %p272 = por %p270, %p271
      %p273 = scmp.ne.s32.totalorder %s261, %s262
      %p274 = scmp.eq.s32.totalorder %s28, 1
      %p275 = por %p273, %p274
      %p277 = scmp.ne.s32.totalorder %s262, %s276
      %p278 = scmp.eq.s32.totalorder %s28, 0
      %p279 = por %p277, %p278
      %s280 = ssub.s32 %s29, %s41
      %s281 = ssub.s32 %s30, %s37
      %s282 = sor.u32 %s280, %s281
      %p283 = scmp.eq.s32.totalorder %s282, 0
      %s285 = sadd.s32 %s284, 1
      %s286 = scalar_select %p283, %s284, %s285
      %p289 = pneg %p283
      %p290 = scmp.eq.s32.totalorder %s22, 1
      %p291 = por %p289, %p290
      %p292 = scmp.ne.s32.totalorder %s284, %s287
      %p293 = scmp.eq.s32.totalorder %s22, 0
      %p294 = por %p292, %p293
      %p295 = scmp.ne.s32.totalorder %s284, %s287
      %p296 = scmp.eq.s32.totalorder %s27, 1
      %p297 = por %p295, %p296
      %p298 = scmp.ne.s32.totalorder %s287, %s288
      %p299 = scmp.eq.s32.totalorder %s27, 0
      %p300 = por %p298, %p299
      %p301 = scmp.ne.s32.totalorder %s287, %s288
      %p302 = scmp.eq.s32.totalorder %s28, 1
      %p303 = por %p301, %p302
      %p305 = scmp.ne.s32.totalorder %s288, %s304
      %p306 = scmp.eq.s32.totalorder %s28, 0
      %p307 = por %p305, %p306
      %p308 = scmp.le.s32.totalorder 1, %s22
      %p309 = scmp.lt.s32.totalorder %s22, 3
      %p310 = pnand %p308, %p309
      %p311 = pneg %p310
      // Predicated region
      $region9: #{tpu_custom_call.1} parent=5 // pred_check
        _
      $region10: #{tpu_custom_call.1} parent=5 // pred_check_branch
        %313 = sbr.rel (%p310) target = $region12
      $region11: #{tpu_custom_call.1} parent=5 // pred_region
        %s314 = ssub.s32 %s22, 1
        // Predicated region
        $region13: #{tpu_custom_call.1} parent=11 // pred_check
          %p315 = pneg %p167
        $region14: #{tpu_custom_call.1} parent=11 // pred_check_branch
          %317 = sbr.rel (%p315) target = $region16
        $region15: #{tpu_custom_call.1} parent=11 // pred_region
          _
        $region16: #{tpu_custom_call.1} parent=11 // pred_fallthru
          _
        // Predicated region
        $region17: #{tpu_custom_call.1} parent=11 // pred_check
          %p318 = pneg %p188
        $region18: #{tpu_custom_call.1} parent=11 // pred_check_branch
          %320 = sbr.rel (%p318) target = $region20
        $region19: #{tpu_custom_call.1} parent=11 // pred_region
          _
        $region20: #{tpu_custom_call.1} parent=11 // pred_fallthru
          _
        // Predicated region
        $region21: #{tpu_custom_call.1} parent=11 // pred_check
          %p321 = pneg %p209
        $region22: #{tpu_custom_call.1} parent=11 // pred_check_branch
          %323 = sbr.rel (%p321) target = $region24
        $region23: #{tpu_custom_call.1} parent=11 // pred_region
          _
        $region24: #{tpu_custom_call.1} parent=11 // pred_fallthru
          _
        // Predicated region
        $region25: #{tpu_custom_call.1} parent=11 // pred_check
          %p324 = pneg %p230
        $region26: #{tpu_custom_call.1} parent=11 // pred_check_branch
          %326 = sbr.rel (%p324) target = $region28
        $region27: #{tpu_custom_call.1} parent=11 // pred_region
          _
        $region28: #{tpu_custom_call.1} parent=11 // pred_fallthru
          _
        // Predicated region
        $region29: #{tpu_custom_call.1} parent=11 // pred_check
          %p327 = pneg %p251
        $region30: #{tpu_custom_call.1} parent=11 // pred_check_branch
          %329 = sbr.rel (%p327) target = $region32
        $region31: #{tpu_custom_call.1} parent=11 // pred_region
          _
        $region32: #{tpu_custom_call.1} parent=11 // pred_fallthru
          _
        // Predicated region
        $region33: #{tpu_custom_call.1} parent=11 // pred_check
          %p330 = pneg %p272
        $region34: #{tpu_custom_call.1} parent=11 // pred_check_branch
          %332 = sbr.rel (%p330) target = $region36
        $region35: #{tpu_custom_call.1} parent=11 // pred_region
          _
        $region36: #{tpu_custom_call.1} parent=11 // pred_fallthru
          _
      $region12: #{tpu_custom_call.1} parent=5 // pred_fallthru
        _
      %p333 = scmp.lt.s32.totalorder %s22, 2
      // Predicated region
      $region37: #{tpu_custom_call.1} parent=5 // pred_check
        %p334 = pneg %p333
      $region38: #{tpu_custom_call.1} parent=5 // pred_check_branch
        %336 = sbr.rel (%p334) target = $region40
      $region39: #{tpu_custom_call.1} parent=5 // pred_region
        // Predicated region
        $region41: #{tpu_custom_call.1} parent=39 // pred_check
          %p337 = pneg %p56
        $region42: #{tpu_custom_call.1} parent=39 // pred_check_branch
          %339 = sbr.rel (%p337) target = $region44
        $region43: #{tpu_custom_call.1} parent=39 // pred_region
          %p340 = scmp.lt.s32.totalorder %s29, 1
          %s341 = scalar_select %p340, %s29, 1
          %p342 = scmp.lt.s32.totalorder %s30, 0
          %s343 = scalar_select %p342, %s30, 0
          %s344 = smul.addr %s341, 2
          %s345 = sadd.s32 %s343, %s344
          %s346 = smul.addr %s345, 8
          %s347 = scalar_lea.vmem %s0, %s346
        $region44: #{tpu_custom_call.1} parent=39 // pred_fallthru
          _
        // Predicated region
        $region45: #{tpu_custom_call.1} parent=39 // pred_check
          %p348 = pneg %p84
        $region46: #{tpu_custom_call.1} parent=39 // pred_check_branch
          %350 = sbr.rel (%p348) target = $region48
        $region47: #{tpu_custom_call.1} parent=39 // pred_region
          %p351 = scmp.lt.s32.totalorder %s29, 1
          %s352 = scalar_select %p351, %s29, 1
          %p353 = scmp.lt.s32.totalorder %s30, 0
          %s354 = scalar_select %p353, %s30, 0
          %s355 = smul.addr %s354, 2
          %s356 = smul.addr %s352, 2
          %s357 = sadd.s32 %s355, %s356
          %s358 = smul.addr %s357, 8
          %s359 = scalar_lea.vmem %s1, %s358
        $region48: #{tpu_custom_call.1} parent=39 // pred_fallthru
          _
        // Predicated region
        $region49: #{tpu_custom_call.1} parent=39 // pred_check
          %p360 = pneg %p112
        $region50: #{tpu_custom_call.1} parent=39 // pred_check_branch
          %362 = sbr.rel (%p360) target = $region52
        $region51: #{tpu_custom_call.1} parent=39 // pred_region
          %p363 = scmp.lt.s32.totalorder %s29, 1
          %s364 = scalar_select %p363, %s29, 1
          %p365 = scmp.lt.s32.totalorder %s30, 0
          %s366 = scalar_select %p365, %s30, 0
          %s367 = smul.addr %s366, 2
          %s368 = smul.addr %s364, 2
          %s369 = sadd.s32 %s367, %s368
          %s370 = smul.addr %s369, 8
          %s371 = scalar_lea.vmem %s2, %s370
        $region52: #{tpu_custom_call.1} parent=39 // pred_fallthru
          _
        // Predicated region
        $region53: #{tpu_custom_call.1} parent=39 // pred_check
          %p372 = pneg %p140
        $region54: #{tpu_custom_call.1} parent=39 // pred_check_branch
          %374 = sbr.rel (%p372) target = $region56
        $region55: #{tpu_custom_call.1} parent=39 // pred_region
          %s375 = sand.u32 %s130, 1
          %s376 = scalar_lea.sflag [#allocation3], %s375
          %s377 = sand.u32 %s130, 1
          %s378 = scalar_lea.vmem [#allocation2], %s377
          %380 = vsyncadd %s376, 0
          %s381 = sadd.s32 %s30, %s29
          %s382 = scalar_lea.hbm %s3, %s381
          %s384 = sshll.u32 %s382, 4
          %s385 = int_to_ptr.hbm [resolvable:$true] %s384
          %s386 = sshll.u32 %s378, 4
          %s387 = int_to_ptr.vmem [resolvable:$true] %s386
          %389 = dma.hbm_to_vmem [thread:$0]  %s385, 16, %s387, %s376
        $region56: #{tpu_custom_call.1} parent=39 // pred_fallthru
          _
      $region40: #{tpu_custom_call.1} parent=5 // pred_fallthru
        _
      %p390 = scmp.le.s32.totalorder 1, %s22
      %p391 = scmp.lt.s32.totalorder %s22, 3
      %p392 = pnand %p390, %p391
      %p393 = pneg %p392
      // Predicated region
      $region57: #{tpu_custom_call.1} parent=5 // pred_check
        _
      $region58: #{tpu_custom_call.1} parent=5 // pred_check_branch
        %395 = sbr.rel (%p392) target = $region60
      $region59: #{tpu_custom_call.1} parent=5 // pred_region
        %s396 = ssub.s32 %s22, 1
        %s397 = sand.u32 %s133, 1
        %s398 = scalar_lea.sflag [#allocation3], %s397
        %s399 = sand.u32 %s133, 1
        %s400 = scalar_lea.vmem [#allocation2], %s399
        // Predicated region
        $region61: #{tpu_custom_call.1} parent=59 // pred_check
          %p401 = pneg %p146
        $region62: #{tpu_custom_call.1} parent=59 // pred_check_branch
          %403 = sbr.rel (%p401) target = $region64
        $region63: #{tpu_custom_call.1} parent=59 // pred_region
          %405 = dma.done %s398, 16
        $region64: #{tpu_custom_call.1} parent=59 // pred_fallthru
          _
        %p406 = scmp.lt.s32.totalorder %s31, 1
        %s407 = scalar_select %p406, %s31, 1
        %p408 = scmp.lt.s32.totalorder %s32, 0
        %s409 = scalar_select %p408, %s32, 0
        %s410 = smul.addr %s407, 2
        %s411 = sadd.s32 %s409, %s410
        %s412 = smul.addr %s411, 8
        %s413 = scalar_lea.vmem %s0, %s412
        %p414 = pneg %p62
        %p415 = pneg %p59
        %p416 = scmp.lt.s32.totalorder %s31, 1
        %s417 = scalar_select %p416, %s31, 1
        %p418 = scmp.lt.s32.totalorder %s32, 0
        %s419 = scalar_select %p418, %s32, 0
        %s420 = smul.addr %s419, 2
        %s421 = smul.addr %s417, 2
        %s422 = sadd.s32 %s420, %s421
        %s423 = smul.addr %s422, 8
        %s424 = scalar_lea.vmem %s1, %s423
        %p425 = pneg %p90
        %p426 = pneg %p87
        %p427 = scmp.lt.s32.totalorder %s31, 1
        %s428 = scalar_select %p427, %s31, 1
        %p429 = scmp.lt.s32.totalorder %s32, 0
        %s430 = scalar_select %p429, %s32, 0
        %s431 = smul.addr %s430, 2
        %s432 = smul.addr %s428, 2
        %s433 = sadd.s32 %s431, %s432
        %s434 = smul.addr %s433, 8
        %s435 = scalar_lea.vmem %s2, %s434
        %p436 = pneg %p118
        %p437 = pneg %p115
        %s438 = sand.u32 %s133, 1
        %s439 = scalar_lea.sflag [#allocation3], %s438
        %s440 = sand.u32 %s133, 1
        %s441 = scalar_lea.vmem [#allocation2], %s440
        %p442 = pneg %p146
        %p443 = pneg %p143
        %p444 = pneg %p167
        %p445 = pneg %p164
        %p446 = pneg %p188
        %p447 = pneg %p185
        %p448 = pneg %p209
        %p449 = pneg %p206
        %p450 = pneg %p230
        %p451 = pneg %p227
        %p452 = pneg %p251
        %p453 = pneg %p248
        %p454 = pneg %p272
        %p455 = pneg %p269
        %p456 = pneg %p300
        %p457 = pneg %p297
        %s458 = sand.u32 %s287, 1
        %s459 = scalar_lea.sflag [#allocation4], %s458
        %s460 = sand.u32 %s287, 1
        %s461 = smul.addr %s460, 16
        %s462 = scalar_lea.vmem [#allocation5], %s461
        %p463 = scmp.lt.s32.totalorder %s31, 1
        %s464 = scalar_select %p463, %s31, 1
        %p465 = scmp.lt.s32.totalorder %s32, 0
        %s466 = scalar_select %p465, %s32, 0
        %s467 = smul.addr %s464, 2
        %s468 = sadd.s32 %s466, %s467
        %s469 = smul.addr %s468, 8
        %s470 = scalar_lea.vmem %s0, %s469
        %p471 = scmp.lt.s32.totalorder %s31, 1
        %s472 = scalar_select %p471, %s31, 1
        %p473 = scmp.lt.s32.totalorder %s32, 0
        %s474 = scalar_select %p473, %s32, 0
        %s475 = smul.addr %s474, 2
        %s476 = smul.addr %s472, 2
        %s477 = sadd.s32 %s475, %s476
        %s478 = smul.addr %s477, 8
        %s479 = scalar_lea.vmem %s1, %s478
        %p480 = scmp.lt.s32.totalorder %s31, 1
        %s481 = scalar_select %p480, %s31, 1
        %p482 = scmp.lt.s32.totalorder %s32, 0
        %s483 = scalar_select %p482, %s32, 0
        %s484 = smul.addr %s483, 2
        %s485 = smul.addr %s481, 2
        %s486 = sadd.s32 %s484, %s485
        %s487 = smul.addr %s486, 8
        %s488 = scalar_lea.vmem %s2, %s487
        %v489 = vld [vmem:[%s470] sm:$0xff]
        %v490 = vld [vmem:[%s470 + $0x8] sm:$0xff]
        %v491 = vld [vmem:[%s479] sm:$0xff]
        %v492 = vld [vmem:[%s479 + $0x8] sm:$0xff]
        %v493 = vld [vmem:[%s488] sm:$0xff]
        %v494 = vld [vmem:[%s488 + $0x8] sm:$0xff]
        %497 = vrot.lane.b32.xlu0 %v489, 2
        %v498 = vpop.permute.xlu0 %497
        %499 = vrot.lane.b32.xlu0 %v490, 2
        %v500 = vpop.permute.xlu0 %499
        %vm503 = vcmask 15360
        %v504 = vsel %vm503, %v491, %v498
        %v505 = vsel %vm503, %v492, %v500
        %506 = vrot.lane.b32.xlu0 %v489, 126
        %v507 = vpop.permute.xlu0 %506
        %508 = vrot.lane.b32.xlu0 %v490, 126
        %v509 = vpop.permute.xlu0 %508
        %514 = vrot.lane.b32.xlu0 %v493, 126
        %v515 = vpop.permute.xlu0 %514
        %516 = vrot.lane.b32.xlu0 %v494, 126
        %v517 = vpop.permute.xlu0 %516
        %vm520 = vcmask 1031168
        %v521 = vsel %vm520, %v507, %v515
        %v522 = vsel %vm520, %v509, %v517
        %v523 = vld [vmem:[%s5] sm:$0xff]
        %v524 = vld [vmem:[%s5 + $0x8] sm:$0xff]
        %v525 = vld [vmem:[%s4] sm:$0xff]
        %v526 = vld [vmem:[%s4 + $0x8] sm:$0xff]
        %vm527 = vcmask 130048
        %v529 = vsel %vm527, %v525, 0
        %v532 = vsel %vm527, %v526, 0
        %534 = vmatpush.msra.mxu0 0.0
        %535 = vmatpush.msra.mxu0 0.0
        %536 = vmatpush.msra.mxu0 0.0
        %537 = vmatpush.msra.mxu0 0.0
        %538 = vmatpush.msra.mxu0 0.0
        %539 = vmatpush.msra.mxu0 0.0
        %540 = vmatpush.msra.mxu0 0.0
        %541 = vmatpush.msra.mxu0 0.0
        %542 = vmatpush.msra.mxu0 0.0
        %543 = vmatpush.msra.mxu0 0.0
        %544 = vmatpush.msra.mxu0 0.0
        %545 = vmatpush.msra.mxu0 0.0
        %546 = vmatpush.msra.mxu0 0.0
        %547 = vmatpush.msra.mxu0 0.0
        %548 = vmatpush.msra.mxu0 %v505
        %549 = vmatpush.msra.mxu0 %v504
        %550 = vmatmul.f32.gmra.mxu0 %v529
        %v551 = vpop.f32.mrf.mxu0
        %v552 = vadd.f32 0.0, %v551
        %553 = vmatmul.f32.gmra.mxu0 %v532
        %v554 = vpop.f32.mrf.mxu0
        %v555 = vadd.f32 0.0, %v554
        %556 = vdwg.mxu0
        %v558 = vsel %vm527, %v523, 0
        %v561 = vsel %vm527, %v524, 0
        %563 = vmatpush.msra.mxu0 0.0
        %564 = vmatpush.msra.mxu0 0.0
        %565 = vmatpush.msra.mxu0 0.0
        %566 = vmatpush.msra.mxu0 0.0
        %567 = vmatpush.msra.mxu0 0.0
        %568 = vmatpush.msra.mxu0 0.0
        %569 = vmatpush.msra.mxu0 0.0
        %570 = vmatpush.msra.mxu0 0.0
        %571 = vmatpush.msra.mxu0 0.0
        %572 = vmatpush.msra.mxu0 0.0
        %573 = vmatpush.msra.mxu0 0.0
        %574 = vmatpush.msra.mxu0 0.0
        %575 = vmatpush.msra.mxu0 0.0
        %576 = vmatpush.msra.mxu0 0.0
        %577 = vmatpush.msra.mxu0 %v490
        %578 = vmatpush.msra.mxu0 %v489
        %579 = vmatmul.f32.gmra.mxu0 %v558
        %v580 = vpop.f32.mrf.mxu0
        %v581 = vadd.f32 %v552, %v580
        %582 = vmatmul.f32.gmra.mxu0 %v561
        %v583 = vpop.f32.mrf.mxu0
        %v584 = vadd.f32 %v555, %v583
        %585 = vdwg.mxu0
        %v586 = vld [vmem:[%s6] sm:$0xff]
        %v587 = vld [vmem:[%s6 + $0x8] sm:$0xff]
        %v589 = vsel %vm527, %v586, 0
        %v592 = vsel %vm527, %v587, 0
        %594 = vmatpush.msra.mxu0 0.0
        %595 = vmatpush.msra.mxu0 0.0
        %596 = vmatpush.msra.mxu0 0.0
        %597 = vmatpush.msra.mxu0 0.0
        %598 = vmatpush.msra.mxu0 0.0
        %599 = vmatpush.msra.mxu0 0.0
        %600 = vmatpush.msra.mxu0 0.0
        %601 = vmatpush.msra.mxu0 0.0
        %602 = vmatpush.msra.mxu0 0.0
        %603 = vmatpush.msra.mxu0 0.0
        %604 = vmatpush.msra.mxu0 0.0
        %605 = vmatpush.msra.mxu0 0.0
        %606 = vmatpush.msra.mxu0 0.0
        %607 = vmatpush.msra.mxu0 0.0
        %608 = vmatpush.msra.mxu0 %v522
        %609 = vmatpush.msra.mxu0 %v521
        %610 = vmatmul.f32.gmra.mxu0 %v589
        %v611 = vpop.f32.mrf.mxu0
        %v612 = vadd.f32 0.0, %v611
        %613 = vmatmul.f32.gmra.mxu0 %v592
        %v614 = vpop.f32.mrf.mxu0
        %v615 = vadd.f32 0.0, %v614
        %616 = vdwg.mxu0
        %v617 = vadd.f32 %v581, %v612
        %v618 = vadd.f32 %v584, %v615
        %v619 = vld [vmem:[%s7] sm:$0xff]
        %v620 = vld [vmem:[%s7 + $0x8] sm:$0xff]
        %622 = vset.pattern.permute.xlu0 0
        %623 = vperm.xlu0 %622, %v619
        %v624 = vpop.permute.xlu0 %623
        %627 = vset.pattern.permute.xlu0 0
        %628 = vperm.xlu0 %627, %v620
        %v629 = vpop.permute.xlu0 %628
        %v631 = vadd.f32 %v617, %v624
        %v632 = vadd.f32 %v618, %v629
        %v633 = vmax.f32 %v631, 0.0
        %v634 = vmax.f32 %v632, 0.0
        %v635 = vld [vmem:[%s8] sm:$0xff]
        %v636 = vld [vmem:[%s8 + $0x8] sm:$0xff]
        %v637 = vld [vmem:[%s9] sm:$0xff]
        %v638 = vld [vmem:[%s9 + $0x8] sm:$0xff]
        %640 = vset.pattern.permute.xlu0 0
        %641 = vperm.xlu0 %640, %v637
        %v642 = vpop.permute.xlu0 %641
        %645 = vset.pattern.permute.xlu0 0
        %646 = vperm.xlu0 %645, %v638
        %v647 = vpop.permute.xlu0 %646
        %v650 = vsel %vm527, %v635, 0
        %v653 = vsel %vm527, %v636, 0
        %655 = vmatpush.msra.mxu0 0.0
        %656 = vmatpush.msra.mxu0 0.0
        %657 = vmatpush.msra.mxu0 0.0
        %658 = vmatpush.msra.mxu0 0.0
        %659 = vmatpush.msra.mxu0 0.0
        %660 = vmatpush.msra.mxu0 0.0
        %661 = vmatpush.msra.mxu0 0.0
        %662 = vmatpush.msra.mxu0 0.0
        %663 = vmatpush.msra.mxu0 0.0
        %664 = vmatpush.msra.mxu0 0.0
        %665 = vmatpush.msra.mxu0 0.0
        %666 = vmatpush.msra.mxu0 0.0
        %667 = vmatpush.msra.mxu0 0.0
        %668 = vmatpush.msra.mxu0 0.0
        %669 = vmatpush.msra.mxu0 %v634
        %670 = vmatpush.msra.mxu0 %v633
        %671 = vmatmul.f32.gmra.mxu0 %v650
        %v672 = vpop.f32.mrf.mxu0
        %v673 = vadd.f32 %v642, %v672
        %674 = vmatmul.f32.gmra.mxu0 %v653
        %v675 = vpop.f32.mrf.mxu0
        %v676 = vadd.f32 %v647, %v675
        %677 = vdwg.mxu0
        %v678 = vadd.f32 %v489, %v673
        %v679 = vadd.f32 %v490, %v676
        %v680 = vld [vmem:[%s400] sm:$0x1]
        %v682 = vperm.slane %v680, 0
        %v684 = vmul.f32 %v678, %v682
        %v685 = vmul.f32 %v679, %v682
        %686 = vst [vmem:[%s462] sm:$0xff] %v684
        %687 = vst [vmem:[%s462 + $0x8] sm:$0xff] %v685
        %s688 = sand.u32 %s287, 1
        %s689 = scalar_lea.sflag [#allocation4], %s688
        %s690 = sand.u32 %s287, 1
        %s691 = smul.addr %s690, 16
        %s692 = scalar_lea.vmem [#allocation5], %s691
        // Predicated region
        $region65: #{tpu_custom_call.1} parent=59 // pred_check
          %p693 = pneg %p297
        $region66: #{tpu_custom_call.1} parent=59 // pred_check_branch
          %695 = sbr.rel (%p693) target = $region68
        $region67: #{tpu_custom_call.1} parent=59 // pred_region
          %697 = vsyncadd %s689, 0
          %s698 = smul.addr %s31, 2
          %s699 = sadd.s32 %s32, %s698
          %s700 = smul.addr %s699, 8
          %s701 = scalar_lea.hbm %s10, %s700
          %s702 = sshll.u32 %s692, 4
          %s703 = int_to_ptr.vmem [resolvable:$true] %s702
          %s704 = sshll.u32 %s701, 4
          %s705 = int_to_ptr.hbm [resolvable:$true] %s704
          %710 = dma.vmem_to_hbm [thread:$0]  %s703, 256, %s705, %s689, 128, 128, 8
        $region68: #{tpu_custom_call.1} parent=59 // pred_fallthru
          _
      $region60: #{tpu_custom_call.1} parent=5 // pred_fallthru
        _
      %p711 = scmp.le.s32.totalorder 2, %s22
      // Predicated region
      $region69: #{tpu_custom_call.1} parent=5 // pred_check
        %p712 = pneg %p711
      $region70: #{tpu_custom_call.1} parent=5 // pred_check_branch
        %714 = sbr.rel (%p712) target = $region72
      $region71: #{tpu_custom_call.1} parent=5 // pred_region
        %s715 = ssub.s32 %s22, 2
        // Predicated region
        $region73: #{tpu_custom_call.1} parent=71 // pred_check
          %p716 = pneg %p303
        $region74: #{tpu_custom_call.1} parent=71 // pred_check_branch
          %718 = sbr.rel (%p716) target = $region76
        $region75: #{tpu_custom_call.1} parent=71 // pred_region
          %s719 = sand.u32 %s288, 1
          %s720 = scalar_lea.sflag [#allocation4], %s719
          %s721 = sand.u32 %s288, 1
          %s722 = smul.addr %s721, 16
          %s723 = scalar_lea.vmem [#allocation5], %s722
          %725 = dma.done %s720, 256
        $region76: #{tpu_custom_call.1} parent=71 // pred_fallthru
          _
      $region72: #{tpu_custom_call.1} parent=5 // pred_fallthru
        _
    $region6: #{tpu_custom_call.1} parent=1 // loop_footer
      %s26 = sadd.s32 1, %s22
    $region7: #{tpu_custom_call.1} parent=1 // loop_footer_branch
      %21 = sbr.rel target = $region3
    $region8: #{tpu_custom_call.1} parent=1 // loop_exit
      _
    %726 = vsyncpa [#allocation3], 1
    %s727 = scalar_lea.sflag [#allocation3], 1
    %728 = vsyncpa %s727, 1
    %729 = vsyncpa [#allocation4], 1
    %s730 = scalar_lea.sflag [#allocation4], 1
    %731 = vsyncpa %s730, 1

</llo_original>
